<compile_context>
chip_gen: v7x
topology: tpu7x:2x2x1
jax: 0.10.0
libtpu: 0.0.40
codegen_flags: <defaults>
</compile_context>

<pallas_src>
import functools

import jax
import jax.numpy as jnp
from jax.experimental import pallas as pl
from jax.experimental.pallas import tpu as pltpu

_LANE = 128
_MIB = 1024 * 1024


def _round_down(x, m):
    return (x // m) * m


def _round_up(x, m):
    return ((x + m - 1) // m) * m


def _vmem_limit_bytes():
    """Generation-aware scoped-VMEM budget; conservative if the query fails."""
    try:
        info = pltpu.get_tpu_info()
        phys = int(getattr(info, "vmem_capacity_bytes", 0))
    except Exception:
        phys = 0
    if phys <= 0:
        return 32 * _MIB  # unknown chip: stay under every default scoped limit
    # ~3/4 of physical per-core VMEM, never more than 64 MiB:
    #   v5e/v6e (128 MiB) -> 64 MiB, v7x (64 MiB/TC) -> 48 MiB.
    return int(min(phys * 3 // 4, 64 * _MIB))


def _copy_kernel(in_ref, out_ref):
    # Dense (TB, TL) -> (TB, TL) copy; channel duplication lives entirely in
    # the output index_map (channel-innermost grid => the revisited input
    # block's DMA is skipped, giving ideal 3*B*L bytes of HBM traffic).
    out_ref[...] = in_ref[...]


def _dup_rows_kernel(in_ref, out_ref):
    # (TB, L) -> (TB, 2L): write the mono block twice, side by side.
    x = in_ref[...]
    l = in_ref.shape[-1]
    out_ref[:, :l] = x
    out_ref[:, l:] = x


def mono_to_stereo(input_signals, *, block_cap_bytes=None):
    """Pallas equivalent of MonoToStereo.forward.

    Args:
        input_signals: [B, 1, L] mono audio batch.
        block_cap_bytes: optional override of the per-(input)-block byte
            budget (testing / tuning hook).

    Returns:
        [B, 2, L] stereo batch (both channels identical to the input).
    """
    b, c, l = input_signals.shape
    assert c == 1, "MonoToStereo expects mono input (channel dim == 1)"
    dtype = input_signals.dtype
    itemsize = jnp.dtype(dtype).itemsize
    # Dtype-aware sublane alignment: 8 rows for f32, 16 for bf16, 32 for int8.
    row_align = 8 * max(1, 4 // itemsize)

    vmem_limit = _vmem_limit_bytes()
    # Double-buffered footprint is 4*block (lane-tiled path) or 6*block
    # (row-duplication path, output block is 2x), so cap at vmem_limit/8 to
    # keep >=25% headroom in every path.
    cap = block_cap_bytes if block_cap_bytes is not None else vmem_limit // 8
    cap = max(int(cap), row_align * _LANE * itemsize)

    cost = pl.CostEstimate(
        flops=0, transcendentals=0, bytes_accessed=3 * b * l * itemsize
    )
    cparams = functools.partial(pltpu.CompilerParams, vmem_limit_bytes=vmem_limit)

    x2d = input_signals.reshape(b, l)  # free view of contiguous data

    if l % _LANE == 0:
        # ---------- Lane-aligned fast paths on (B, L) -> (B, 2L) views ------
        # Largest lane tile that (a) divides L, (b) is a 128-multiple and
        # (c) still fits `row_align` rows inside the block byte budget.
        lane_cap = max(_LANE, _round_down(cap // (row_align * itemsize), _LANE))
        tl = _LANE
        m = 2 * _LANE
        lane_stop = min(l, lane_cap)
        while m <= lane_stop:
            if l % m == 0:
                tl = m
            m += _LANE

        # Row tile limited only by the byte budget (no fixed row clamp).
        tb = max(row_align, _round_down(cap // (tl * itemsize), row_align))
        tb = min(tb, b)

        if tl == l:
            # Whole rows fit in one block: one grid step per row block,
            # duplicate inside the kernel (halves the number of grid steps).
            # Guarantee >= 2 parallel steps when there is enough work so both
            # v7x TensorCores get a share (no effect on 1-TC v5e/v6e).
            if tb >= b and b > row_align and b * l * itemsize >= 2 * _MIB:
                tb = min(b, max(row_align, _round_up(pl.cdiv(b, 2), row_align)))
            n_row = pl.cdiv(b, tb)
            out2d = pl.pallas_call(
                _dup_rows_kernel,
                out_shape=jax.ShapeDtypeStruct((b, 2 * l), dtype),
                grid=(n_row,),
                in_specs=[pl.BlockSpec((tb, l), lambda i: (i, 0))],
                out_specs=pl.BlockSpec((tb, 2 * l), lambda i: (i, 0)),
                compiler_params=cparams(dimension_semantics=("parallel",)),
                cost_estimate=cost,
            )(x2d)
            return out2d.reshape(b, 2, l)

        # Lane-tiled path (very long rows): channel axis innermost so the same
        # input block is revisited and its DMA is skipped.  n_lane >= 2 here,
        # so the leading "parallel" axis always feeds both v7x cores.
        n_lane = l // tl
        n_row = pl.cdiv(b, tb)
        out2d = pl.pallas_call(
            _copy_kernel,
            out_shape=jax.ShapeDtypeStruct((b, 2 * l), dtype),
            grid=(n_lane, n_row, 2),
            in_specs=[pl.BlockSpec((tb, tl), lambda j, i, ch: (i, j))],
            out_specs=pl.BlockSpec(
                (tb, tl), lambda j, i, ch: (i, ch * n_lane + j)
            ),
            compiler_params=cparams(
                dimension_semantics=("parallel", "parallel", "arbitrary")
            ),
            cost_estimate=cost,
        )(x2d)
        return out2d.reshape(b, 2, l)

    # ---------- Fallback: L not a multiple of 128 ---------------------------
    # Same 2-D views with full rows per block (full-extent last dims bypass
    # the (8,128) constraint); only the tail of each row is lane-padded in
    # VMEM / mask-stored.  Sizing accounts for that lane padding explicitly.
    l_pad = _round_up(l, _LANE)
    tb = max(1, cap // (l_pad * itemsize))
    tb = min(tb, b)
    if tb < b:
        tb = min(b, max(row_align, _round_down(tb, row_align)))
    # TODO(synk): extremely large non-128-aligned L (one padded row exceeding
    # the block budget) would need an additional lane-tiled masked variant.
    n_row = pl.cdiv(b, tb)
    out2d = pl.pallas_call(
        _dup_rows_kernel,
        out_shape=jax.ShapeDtypeStruct((b, 2 * l), dtype),
        grid=(n_row,),
        in_specs=[pl.BlockSpec((tb, l), lambda i: (i, 0))],
        out_specs=pl.BlockSpec((tb, 2 * l), lambda i: (i, 0)),
        compiler_params=cparams(dimension_semantics=("parallel",)),
        cost_estimate=cost,
    )(x2d)
    return out2d.reshape(b, 2, l)


if __name__ == "__main__":
    key = jax.random.PRNGKey(0)
    B = 2

    # 1) Lane-aligned, whole row fits in a block -> single-step duplication path.
    L1 = 256
    x1 = jax.random.normal(key, (B, 1, L1), dtype=jnp.float32)
    y1 = jax.block_until_ready(mono_to_stereo(x1))
    assert y1.shape == (B, 2, L1), y1.shape
    assert jnp.array_equal(y1, jnp.tile(x1, (1, 2, 1))), "mismatch (row-dup path)"

    # 2) Lane-aligned with a tiny forced block budget -> channel-innermost grid path.
    L2 = 384
    x2 = jax.random.normal(jax.random.PRNGKey(0), (B, 1, L2), dtype=jnp.float32)
    y2 = jax.block_until_ready(
        mono_to_stereo(x2, block_cap_bytes=_LANE * 8 * 4)  # tl=128, n_lane=3
    )
    assert y2.shape == (B, 2, L2), y2.shape
    assert jnp.array_equal(y2, jnp.tile(x2, (1, 2, 1))), "mismatch (lane-tiled path)"

    # 3) Non-128-aligned L -> 2-D fallback path.
    L3 = 96
    x3 = jax.random.normal(jax.random.PRNGKey(0), (B, 1, L3), dtype=jnp.float32)
    y3 = jax.block_until_ready(mono_to_stereo(x3))
    assert y3.shape == (B, 2, L3), y3.shape
    assert jnp.array_equal(y3, jnp.tile(x3, (1, 2, 1))), "mismatch (fallback path)"

    print("KERNEL_OK")
</pallas_src>

<mosaic_0001>
module attributes {stable_mosaic.version = 11 : i64} {
  func.func @_dup_rows_kernel(%arg0: i32, %arg1: memref<2x256xf32, #tpu.memory_space<vmem>>, %arg2: memref<2x512xf32, #tpu.memory_space<vmem>>) attributes {dimension_semantics = [#tpu.dimension_semantics<parallel>], iteration_bounds = array<i64: 1>, scalar_prefetch = 0 : i64, scratch_operands = 0 : i64, tpu.core_type = #tpu.core_type<tc>, window_params = [{transform_indices = @transform_0, window_bounds = array<i64: 2, 256>}, {transform_indices = @transform_1, window_bounds = array<i64: 2, 512>}]} {
    %c0 = arith.constant 0 : index
    %c0_0 = arith.constant 0 : index
    %0 = vector.load %arg1[%c0, %c0_0] : memref<2x256xf32, #tpu.memory_space<vmem>>, vector<2x256xf32>
    %c0_1 = arith.constant 0 : index
    %c0_2 = arith.constant 0 : index
    %1 = vector.load %arg2[%c0_1, %c0_2] : memref<2x512xf32, #tpu.memory_space<vmem>>, vector<2x256xf32>
    tpu.vector_store %arg2[%c0_1, %c0_2], %0 {strides = array<i32>} : memref<2x512xf32, #tpu.memory_space<vmem>>, vector<2x256xf32>,
    %c0_3 = arith.constant 0 : index
    %c256 = arith.constant 256 : index
    %2 = vector.load %arg2[%c0_3, %c256] : memref<2x512xf32, #tpu.memory_space<vmem>>, vector<2x256xf32>
    tpu.vector_store %arg2[%c0_3, %c256], %0 {strides = array<i32>} : memref<2x512xf32, #tpu.memory_space<vmem>>, vector<2x256xf32>,
    return
  }
  func.func @transform_0(%arg0: i32) -> (i32, i32) {
    %c0_i32 = arith.constant 0 : i32
    %c0_i32_0 = arith.constant 0 : i32
    return %arg0, %c0_i32 : i32, i32
  }
  func.func @transform_1(%arg0: i32) -> (i32, i32) {
    %c0_i32 = arith.constant 0 : i32
    %c0_i32_0 = arith.constant 0 : i32
    return %arg0, %c0_i32 : i32, i32
  }
}

</mosaic_0001>

<llo_original>
// kernel: tpu_custom_call.1
$region0: #{tpu_custom_call.1}
  #allocation0 [shape = 'u32[]', space=smem, size = 0x4, offset = 0x4, fixed_abs, tag = 'smem constant byte address 0x4 - core index']
  #allocation1 [shape = 'u32[144,128]{1,0:T(1,128)}', space=vmem, size = 0x12000, scoped, tag = 'internal scratch']
  %s0 = inlined_call_operand.hbm [shape: f32[2,256], index: 0, kind: input, shape index: {}]
  %s1 = inlined_call_operand.hbm [shape: f32[2,512], index: 1, kind: output, shape index: {}]
  %s2 = sld [smem:[#allocation0]]
  $region18: #{tpu_custom_call.1} parent=0
    _
  %s4 = ssub.s32 1, %s2
  %s5 = scalar_select 0, %s4, %s2
  $region1: #{tpu_custom_call.1} parent=0
    #allocation2 [shape = 'u8[2048]{0}', space=vmem, size = 0x800, scoped, tag = 'input window, operand 0, single buffered']
    #allocation3 [shape = 's32[1]{0}', space=sflag, size = 0x4, scoped, tag = 'scoped memory for tpu_custom_call.1']
    #allocation4 [shape = 's32[1]{0}', space=sflag, size = 0x4, scoped, tag = 'scoped memory for tpu_custom_call.1']
    #allocation5 [shape = 'u8[4096]{0}', space=vmem, size = 0x1000, scoped, tag = 'output window, operand 0, single buffered']
    %6 = vsyncpa [#allocation3], 0
    %7 = vsyncpa [#allocation4], 0
    // Predicated region
    $region2: #{tpu_custom_call.1} parent=1 // pred_check
      _
    $region3: #{tpu_custom_call.1} parent=1 // pred_check_branch
      %9 = sbr.rel (0) target = $region5
    $region4: #{tpu_custom_call.1} parent=1 // pred_region
      %s11 = ssub.s32 64, 64
      %12 = vsyncadd [#allocation3], %s11
      %s14 = sshll.u32 [#allocation2], 4
      %s15 = int_to_ptr.vmem [resolvable:$true] %s14
      %17 = dma.hbm_to_vmem [thread:$0]  %s0, 64, %s15, [#allocation3]
    $region5: #{tpu_custom_call.1} parent=1 // pred_fallthru
      _
    // Predicated region
    $region6: #{tpu_custom_call.1} parent=1 // pred_check
      _
    $region7: #{tpu_custom_call.1} parent=1 // pred_check_branch
      %19 = sbr.rel (0) target = $region9
    $region8: #{tpu_custom_call.1} parent=1 // pred_region
      %20 = dma.done [#allocation3], 64
    $region9: #{tpu_custom_call.1} parent=1 // pred_fallthru
      _
    %v21 = vld [vmem:[#allocation2] sm:$0xf]
    %22 = vst [vmem:[#allocation5] sm:$0xf] %v21
    %23 = vst [vmem:[#allocation5 + $0x4] sm:$0xf] %v21
    // Predicated region
    $region10: #{tpu_custom_call.1} parent=1 // pred_check
      _
    $region11: #{tpu_custom_call.1} parent=1 // pred_check_branch
      %25 = sbr.rel (0) target = $region13
    $region12: #{tpu_custom_call.1} parent=1 // pred_region
      %s27 = ssub.s32 128, 128
      %28 = vsyncadd [#allocation4], %s27
      %s30 = sshll.u32 [#allocation5], 4
      %s31 = int_to_ptr.vmem [resolvable:$true] %s30
      %33 = dma.vmem_to_hbm [thread:$0]  %s31, 128, %s1, [#allocation4]
    $region13: #{tpu_custom_call.1} parent=1 // pred_fallthru
      _
    // Predicated region
    $region14: #{tpu_custom_call.1} parent=1 // pred_check
      _
    $region15: #{tpu_custom_call.1} parent=1 // pred_check_branch
      %35 = sbr.rel (0) target = $region17
    $region16: #{tpu_custom_call.1} parent=1 // pred_region
      %36 = dma.done [#allocation4], 128
    $region17: #{tpu_custom_call.1} parent=1 // pred_fallthru
      _
    %37 = vsyncpa [#allocation3], 1
    %38 = vsyncpa [#allocation4], 1

</llo_original>
